<compile_context>
chip_gen: v6e
topology: v6e:2x2x1
jax: 0.10.0
libtpu: 0.0.40
codegen_flags: <defaults>
</compile_context>

<pallas_src>
import functools

import jax
import jax.numpy as jnp
from jax.experimental import pallas as pl
from jax.experimental.pallas import tpu as pltpu


def _round_up(v, m):
    return (v + m - 1) // m * m


def _build_pool_mask(H, W, G, dtype):
    """(H*W, G*G) 0/1 mask: flat NCHW spatial index -> adaptive-avg-pool bin.

    The 1/(bh*bw) scale is applied in f32 inside the kernel (exact 0/1 weights
    keep the bf16 matmul path free of extra rounding)."""
    assert H % G == 0 and W % G == 0, "adaptive pool requires H, W divisible by grid_size"
    bh, bw = H // G, W // G
    idx = jnp.arange(H * W)
    h_idx = idx // W
    w_idx = idx % W
    col = (h_idx // bh) * G + (w_idx // bw)
    return (col[:, None] == jnp.arange(G * G)[None, :]).astype(dtype)


def _vmem_limit_bytes():
    """Generation-aware VMEM budget: ~3/4 of physical, capped at 100 MiB."""
    cap = 64 * 1024 * 1024  # safe fallback (v7x physical)
    try:
        cap = int(pltpu.get_tpu_info().vmem_capacity_bytes)
    except Exception:
        pass
    return min((cap * 3) // 4, 100 * 1024 * 1024)


def _choose_tile_n(N, per_sample_bytes, resident_bytes, vmem_limit):
    """Largest batch tile whose double-buffered footprint fits the VMEM budget."""
    budget = int(vmem_limit * 0.7) - resident_bytes
    t = max(budget // max(per_sample_bytes, 1), 8)
    t = min(t, 512)                                   # bound trace / temp sizes
    if N > 8:
        # keep >= 2 grid steps: v7x megacore split + pipelining across steps
        t = min(t, _round_up((N + 1) // 2, 8))
    t = min(t, _round_up(N, 8))
    t = max((t // 8) * 8, 8)
    if N <= t:
        return N                                      # single full-extent tile
    return t


def _projection_head_kernel(
    x_ref,                                   # (tile_n*Cp, HW)   input dtype (e.g. f32)
    p_ref,                                   # (HW, GG)          0/1 bin mask, compute dtype
    w1m_ref, b1m_ref, w2m_ref, b2m_ref,      # MLP head   (Cp,HM),(1,HM),(HM,DM),(1,DM)
    w1d_ref, b1d_ref, w2d_ref, b2d_ref,      # dense head (Cp,HD),(1,HD),(HD,DD),(1,DD)
    mlp_ref,                                 # (tile_n, DM)
    zd_ref,                                  # (tile_n*GG, DD)   rows = (sample, bin)
    *, tile_n, Cp, GG, inv_bin,
):
    cdt = p_ref.dtype

    # ---- adaptive avg-pool: one stacked MXU matmul over all tile_n*Cp rows ----
    xb = x_ref[...].astype(cdt)                                  # in-kernel cast (VPU)
    pooled = jnp.dot(xb, p_ref[...],
                     preferred_element_type=jnp.float32) * inv_bin   # (tile_n*Cp, GG) f32
    pooled3 = pooled.reshape(tile_n, Cp, GG)                     # (n, c, g)  f32

    # ---- global avg pool == mean of the GG equal bins (exact, f32) ------------
    gap = jnp.mean(pooled3, axis=-1)                             # (tile_n, Cp) f32

    # ---- MLP head --------------------------------------------------------------
    h = jnp.dot(gap.astype(cdt), w1m_ref[...],
                preferred_element_type=jnp.float32) + b1m_ref[...]
    h = jnp.maximum(h, 0.0)                                      # f32 elementwise
    mlp = jnp.dot(h.astype(cdt), w2m_ref[...],
                  preferred_element_type=jnp.float32) + b2m_ref[...]
    mlp_ref[...] = mlp.astype(mlp_ref.dtype)

    # ---- dense head (1x1 convs): (n,c,g) -> (n,g,c) with ONE batched transpose -
    pooled_t = jnp.transpose(pooled3, (0, 2, 1)).reshape(tile_n * GG, Cp)
    hd = jnp.dot(pooled_t.astype(cdt), w1d_ref[...],
                 preferred_element_type=jnp.float32) + b1d_ref[...]
    hd = jnp.maximum(hd, 0.0)                                    # f32 elementwise
    zd = jnp.dot(hd.astype(cdt), w2d_ref[...],
                 preferred_element_type=jnp.float32) + b2d_ref[...]
    zd_ref[...] = zd.astype(zd_ref.dtype)


def projection_head_forward(x, params, grid_size, *, use_bf16=False):
    """x: (N, C, H, W). Returns [mlp_out (N,DM), dense_out (N,DD,G*G), dense_pool (N,DD)]."""
    N, C, H, W = x.shape
    G = grid_size
    GG = G * G
    HW = H * W
    assert H % G == 0 and W % G == 0
    bh, bw = H // G, W // G

    w1m, b1m, w2m, b2m, w1d, b1d, w2d, b2d = params
    HM, DM = w1m.shape[1], w2m.shape[1]
    HD, DD = w1d.shape[1], w2d.shape[1]

    compute_dtype = jnp.bfloat16 if use_bf16 else jnp.float32
    out_dtype = jnp.bfloat16 if use_bf16 else jnp.float32
    cdt_item = jnp.dtype(compute_dtype).itemsize
    in_item = jnp.dtype(x.dtype).itemsize
    out_item = jnp.dtype(out_dtype).itemsize

    # Channels padded to a sublane multiple so all in-kernel reshapes are
    # tile-aligned (no-op when C % 8 == 0, i.e. for realistic backbones).
    Cp = _round_up(C, 8)

    vmem_limit = _vmem_limit_bytes()
    per_sample = (2 * Cp * HW * in_item                       # x slab, double-buffered
                  + 2 * (GG * DD + DM) * out_item             # outputs, double-buffered
                  + 4 * (2 * Cp * GG + GG * HD + GG * DD))    # f32 temporaries
    resident = 2 * ((Cp * HM + HM * DM + Cp * HD + HD * DD + HW * GG) * cdt_item
                    + (HM + DM + HD + DD) * 4)
    tile_n = _choose_tile_n(N, per_sample, resident, vmem_limit)
    N_pad = _round_up(N, tile_n)
    n_tiles = N_pad // tile_n

    # x stays in its stored dtype; only zero-pad batch/channels when required.
    x3 = x.reshape(N, C, HW)
    if N_pad != N or Cp != C:
        x3 = jnp.pad(x3, ((0, N_pad - N), (0, Cp - C), (0, 0)))
    x2d = x3.reshape(N_pad * Cp, HW)

    P = _build_pool_mask(H, W, G, compute_dtype)

    def pad_rows(w, r):
        return w if w.shape[0] == r else jnp.pad(w, ((0, r - w.shape[0]), (0, 0)))

    w1m_p = pad_rows(w1m, Cp).astype(compute_dtype)
    w1d_p = pad_rows(w1d, Cp).astype(compute_dtype)
    w2m_p = w2m.astype(compute_dtype)
    w2d_p = w2d.astype(compute_dtype)
    b1m_p = b1m.astype(jnp.float32)
    b2m_p = b2m.astype(jnp.float32)
    b1d_p = b1d.astype(jnp.float32)
    b2d_p = b2d.astype(jnp.float32)

    kernel = functools.partial(_projection_head_kernel, tile_n=tile_n, Cp=Cp, GG=GG,
                               inv_bin=1.0 / float(bh * bw))
    full = lambda i: (0, 0)

    flops = 2 * N_pad * (Cp * HW * GG + GG * (Cp * HD + HD * DD) + Cp * HM + HM * DM)
    bytes_accessed = (N_pad * Cp * HW * in_item
                      + (HW * GG + Cp * HM + HM * DM + Cp * HD + HD * DD) * cdt_item
                      + (HM + DM + HD + DD) * 4
                      + (N_pad * DM + N_pad * GG * DD) * out_item)

    mlp_p, zd_p = pl.pallas_call(
        kernel,
        out_shape=(
            jax.ShapeDtypeStruct((N_pad, DM), out_dtype),
            jax.ShapeDtypeStruct((N_pad * GG, DD), out_dtype),
        ),
        grid_spec=pltpu.PrefetchScalarGridSpec(
            num_scalar_prefetch=0,
            grid=(n_tiles,),
            in_specs=[
                pl.BlockSpec((tile_n * Cp, HW), lambda i: (i, 0)),   # x slab (per tile)
                pl.BlockSpec((HW, GG), full),                        # pooling mask
                pl.BlockSpec((Cp, HM), full),
                pl.BlockSpec((1, HM), full),
                pl.BlockSpec((HM, DM), full),
                pl.BlockSpec((1, DM), full),
                pl.BlockSpec((Cp, HD), full),
                pl.BlockSpec((1, HD), full),
                pl.BlockSpec((HD, DD), full),
                pl.BlockSpec((1, DD), full),
            ],
            out_specs=[
                pl.BlockSpec((tile_n, DM), lambda i: (i, 0)),        # MLP out (true width)
                pl.BlockSpec((tile_n * GG, DD), lambda i: (i, 0)),   # dense map (true width)
            ],
        ),
        compiler_params=pltpu.CompilerParams(
            dimension_semantics=("parallel",),
            vmem_limit_bytes=int(vmem_limit),
        ),
        cost_estimate=pl.CostEstimate(flops=int(flops), transcendentals=0,
                                      bytes_accessed=int(bytes_accessed)),
    )(x2d, P, w1m_p, b1m_p, w2m_p, b2m_p, w1d_p, b1d_p, w2d_p, b2d_p)

    # Cheap XLA-side unpack over the small dense map (a single fused pass):
    # drop batch padding, transpose to (N, DD, GG) and derive the final
    # global-avg-pool of the dense map.
    mlp_out = mlp_p[:N]
    zd = zd_p[:N * GG].reshape(N, GG, DD)
    dense_out = jnp.transpose(zd, (0, 2, 1))                         # (N, DD, GG)
    dense_pool = jnp.mean(zd.astype(jnp.float32), axis=1).astype(out_dtype)
    return [mlp_out, dense_out, dense_pool]


def reference_forward(x, params, grid_size):
    """Pure-JAX reference mirroring the PyTorch module."""
    w1m, b1m, w2m, b2m, w1d, b1d, w2d, b2d = params
    N, C, H, W = x.shape
    G = grid_size

    gap = x.mean(axis=(2, 3))                                        # (N, C)
    mlp = jnp.maximum(gap @ w1m + b1m, 0.0) @ w2m + b2m              # (N, DM)

    bh, bw = H // G, W // G
    pooled = x.reshape(N, C, G, bh, G, bw).mean(axis=(3, 5))         # (N, C, G, G)
    p = pooled.reshape(N, C, G * G).transpose(0, 2, 1)               # (N, GG, C)
    hd = jnp.maximum(jnp.einsum("ngc,ch->ngh", p, w1d) + b1d, 0.0)
    zd = jnp.einsum("ngh,hd->ngd", hd, w2d) + b2d                    # (N, GG, DD)
    dense_out = zd.transpose(0, 2, 1)                                # (N, DD, GG)
    dense_pool = zd.mean(axis=1)                                     # (N, DD)
    return [mlp, dense_out, dense_pool]


if __name__ == "__main__":
    # Small shapes consistent with the module's forward (NCHW, 4D input).
    N, C, H, W = 2, 4, 16, 16
    G = 4                  # grid_size for the dense-head pooling
    HID_M, D_M = 32, 16    # MLP head:   Linear(C, HID_M) -> ReLU -> Linear(HID_M, D_M)
    HID_D, D_D = 32, 16    # dense head: 1x1 Conv(C, HID_D) -> ReLU -> 1x1 Conv(HID_D, D_D)

    key = jax.random.PRNGKey(0)
    ks = jax.random.split(key, 9)
    x = jax.random.normal(ks[0], (N, C, H, W), dtype=jnp.float32)

    scale = 0.05
    params = (
        scale * jax.random.normal(ks[1], (C, HID_M), jnp.float32),    # w1m
        scale * jax.random.normal(ks[2], (1, HID_M), jnp.float32),    # b1m
        scale * jax.random.normal(ks[3], (HID_M, D_M), jnp.float32),  # w2m
        scale * jax.random.normal(ks[4], (1, D_M), jnp.float32),      # b2m
        scale * jax.random.normal(ks[5], (C, HID_D), jnp.float32),    # w1d (1x1 conv)
        scale * jax.random.normal(ks[6], (1, HID_D), jnp.float32),    # b1d
        scale * jax.random.normal(ks[7], (HID_D, D_D), jnp.float32),  # w2d (1x1 conv)
        scale * jax.random.normal(ks[8], (1, D_D), jnp.float32),      # b2d
    )

    refs = reference_forward(x, params, G)

    # Exact f32 path.
    outs = projection_head_forward(x, params, G)
    outs = jax.block_until_ready(outs)
    for o, r in zip(outs, refs):
        assert o.shape == r.shape, (o.shape, r.shape)
        assert jnp.allclose(o, r, atol=1e-4, rtol=1e-4), float(jnp.max(jnp.abs(o - r)))

    # bf16 MXU-operand / f32-accumulation path (perf mode); looser tolerance.
    outs_bf16 = projection_head_forward(x, params, G, use_bf16=True)
    outs_bf16 = jax.block_until_ready(outs_bf16)
    for o, r in zip(outs_bf16, refs):
        assert o.shape == r.shape, (o.shape, r.shape)
        assert jnp.allclose(o.astype(jnp.float32), r, atol=5e-2, rtol=5e-2), \
            float(jnp.max(jnp.abs(o.astype(jnp.float32) - r)))

    print("KERNEL_OK")
</pallas_src>

<mosaic_0001>
module attributes {stable_mosaic.version = 11 : i64} {
  func.func @_projection_head_kernel(%arg0: i32, %arg1: memref<16x256xf32, #tpu.memory_space<vmem>>, %arg2: memref<256x16xf32, #tpu.memory_space<vmem>>, %arg3: memref<8x32xf32, #tpu.memory_space<vmem>>, %arg4: memref<1x32xf32, #tpu.memory_space<vmem>>, %arg5: memref<32x16xf32, #tpu.memory_space<vmem>>, %arg6: memref<1x16xf32, #tpu.memory_space<vmem>>, %arg7: memref<8x32xf32, #tpu.memory_space<vmem>>, %arg8: memref<1x32xf32, #tpu.memory_space<vmem>>, %arg9: memref<32x16xf32, #tpu.memory_space<vmem>>, %arg10: memref<1x16xf32, #tpu.memory_space<vmem>>, %arg11: memref<2x16xf32, #tpu.memory_space<vmem>>, %arg12: memref<32x16xf32, #tpu.memory_space<vmem>>) attributes {dimension_semantics = [#tpu.dimension_semantics<parallel>], iteration_bounds = array<i64: 1>, scalar_prefetch = 0 : i64, scratch_operands = 0 : i64, tpu.core_type = #tpu.core_type<tc>, window_params = [{transform_indices = @transform_0, window_bounds = array<i64: 16, 256>}, {pipeline_mode = #tpu.pipeline_mode<synchronous>, transform_indices = @transform_1, window_bounds = array<i64: 256, 16>}, {pipeline_mode = #tpu.pipeline_mode<synchronous>, transform_indices = @transform_2, window_bounds = array<i64: 8, 32>}, {pipeline_mode = #tpu.pipeline_mode<synchronous>, transform_indices = @transform_3, window_bounds = array<i64: 1, 32>}, {pipeline_mode = #tpu.pipeline_mode<synchronous>, transform_indices = @transform_4, window_bounds = array<i64: 32, 16>}, {pipeline_mode = #tpu.pipeline_mode<synchronous>, transform_indices = @transform_5, window_bounds = array<i64: 1, 16>}, {pipeline_mode = #tpu.pipeline_mode<synchronous>, transform_indices = @transform_6, window_bounds = array<i64: 8, 32>}, {pipeline_mode = #tpu.pipeline_mode<synchronous>, transform_indices = @transform_7, window_bounds = array<i64: 1, 32>}, {pipeline_mode = #tpu.pipeline_mode<synchronous>, transform_indices = @transform_8, window_bounds = array<i64: 32, 16>}, {pipeline_mode = #tpu.pipeline_mode<synchronous>, transform_indices = @transform_9, window_bounds = array<i64: 1, 16>}, {transform_indices = @transform_10, window_bounds = array<i64: 2, 16>}, {transform_indices = @transform_11, window_bounds = array<i64: 32, 16>}]} {
    %c0 = arith.constant 0 : index
    %c0_0 = arith.constant 0 : index
    %0 = vector.load %arg1[%c0, %c0_0] : memref<16x256xf32, #tpu.memory_space<vmem>>, vector<16x256xf32>
    %c0_1 = arith.constant 0 : index
    %c0_2 = arith.constant 0 : index
    %1 = vector.load %arg2[%c0_1, %c0_2] : memref<256x16xf32, #tpu.memory_space<vmem>>, vector<256x16xf32>
    %cst = arith.constant dense<0.000000e+00> : vector<16x16xf32>
    %2 = tpu.matmul %0, %1, %cst {dimension_numbers = #tpu.dot_dimension_numbers<[1], [0], [0], [1], [0, 0, 1, 1], [], []>} : vector<16x256xf32>, vector<256x16xf32>, vector<16x16xf32> -> vector<16x16xf32>
    %cst_3 = arith.constant 6.250000e-02 : f32
    %3 = vector.broadcast %cst_3 : f32 to vector<16x16xf32>
    %4 = arith.mulf %2, %3 : vector<16x16xf32>
    %5 = vector.shape_cast %4 : vector<16x16xf32> to vector<2x8x16xf32>
    %cst_4 = arith.constant dense<0.000000e+00> : vector<2x8xf32>
    %6 = vector.multi_reduction <add>, %5, %cst_4 [2] : vector<2x8x16xf32> to vector<2x8xf32>
    %cst_5 = arith.constant 1.600000e+01 : f32
    %7 = vector.broadcast %cst_5 : f32 to vector<2x8xf32>
    %8 = arith.divf %6, %7 : vector<2x8xf32>
    %c0_6 = arith.constant 0 : index
    %c0_7 = arith.constant 0 : index
    %9 = vector.load %arg3[%c0_6, %c0_7] : memref<8x32xf32, #tpu.memory_space<vmem>>, vector<8x32xf32>
    %cst_8 = arith.constant dense<0.000000e+00> : vector<2x32xf32>
    %10 = tpu.matmul %8, %9, %cst_8 {dimension_numbers = #tpu.dot_dimension_numbers<[1], [0], [0], [1], [0, 0, 1, 1], [], []>} : vector<2x8xf32>, vector<8x32xf32>, vector<2x32xf32> -> vector<2x32xf32>
    %c0_9 = arith.constant 0 : index
    %c0_10 = arith.constant 0 : index
    %11 = vector.load %arg4[%c0_9, %c0_10] : memref<1x32xf32, #tpu.memory_space<vmem>>, vector<1x32xf32>
    %12 = vector.broadcast %11 : vector<1x32xf32> to vector<2x32xf32>
    %13 = arith.addf %10, %12 : vector<2x32xf32>
    %cst_11 = arith.constant 0.000000e+00 : f32
    %14 = vector.broadcast %cst_11 : f32 to vector<2x32xf32>
    %15 = arith.maximumf %13, %14 : vector<2x32xf32>
    %c0_12 = arith.constant 0 : index
    %c0_13 = arith.constant 0 : index
    %16 = vector.load %arg5[%c0_12, %c0_13] : memref<32x16xf32, #tpu.memory_space<vmem>>, vector<32x16xf32>
    %cst_14 = arith.constant dense<0.000000e+00> : vector<2x16xf32>
    %17 = tpu.matmul %15, %16, %cst_14 {dimension_numbers = #tpu.dot_dimension_numbers<[1], [0], [0], [1], [0, 0, 1, 1], [], []>} : vector<2x32xf32>, vector<32x16xf32>, vector<2x16xf32> -> vector<2x16xf32>
    %c0_15 = arith.constant 0 : index
    %c0_16 = arith.constant 0 : index
    %18 = vector.load %arg6[%c0_15, %c0_16] : memref<1x16xf32, #tpu.memory_space<vmem>>, vector<1x16xf32>
    %19 = vector.broadcast %18 : vector<1x16xf32> to vector<2x16xf32>
    %20 = arith.addf %17, %19 : vector<2x16xf32>
    %c0_17 = arith.constant 0 : index
    %c0_18 = arith.constant 0 : index
    %21 = vector.load %arg11[%c0_17, %c0_18] : memref<2x16xf32, #tpu.memory_space<vmem>>, vector<2x16xf32>
    tpu.vector_store %arg11[%c0_17, %c0_18], %20 {strides = array<i32>} : memref<2x16xf32, #tpu.memory_space<vmem>>, vector<2x16xf32>,
    %22 = tpu.transpose %5, [0, 2, 1] : vector<2x8x16xf32> -> vector<2x16x8xf32>
    %23 = vector.shape_cast %22 : vector<2x16x8xf32> to vector<32x8xf32>
    %c0_19 = arith.constant 0 : index
    %c0_20 = arith.constant 0 : index
    %24 = vector.load %arg7[%c0_19, %c0_20] : memref<8x32xf32, #tpu.memory_space<vmem>>, vector<8x32xf32>
    %cst_21 = arith.constant dense<0.000000e+00> : vector<32x32xf32>
    %25 = tpu.matmul %23, %24, %cst_21 {dimension_numbers = #tpu.dot_dimension_numbers<[1], [0], [0], [1], [0, 0, 1, 1], [], []>} : vector<32x8xf32>, vector<8x32xf32>, vector<32x32xf32> -> vector<32x32xf32>
    %c0_22 = arith.constant 0 : index
    %c0_23 = arith.constant 0 : index
    %26 = vector.load %arg8[%c0_22, %c0_23] : memref<1x32xf32, #tpu.memory_space<vmem>>, vector<1x32xf32>
    %27 = vector.broadcast %26 : vector<1x32xf32> to vector<32x32xf32>
    %28 = arith.addf %25, %27 : vector<32x32xf32>
    %cst_24 = arith.constant 0.000000e+00 : f32
    %29 = vector.broadcast %cst_24 : f32 to vector<32x32xf32>
    %30 = arith.maximumf %28, %29 : vector<32x32xf32>
    %c0_25 = arith.constant 0 : index
    %c0_26 = arith.constant 0 : index
    %31 = vector.load %arg9[%c0_25, %c0_26] : memref<32x16xf32, #tpu.memory_space<vmem>>, vector<32x16xf32>
    %cst_27 = arith.constant dense<0.000000e+00> : vector<32x16xf32>
    %32 = tpu.matmul %30, %31, %cst_27 {dimension_numbers = #tpu.dot_dimension_numbers<[1], [0], [0], [1], [0, 0, 1, 1], [], []>} : vector<32x32xf32>, vector<32x16xf32>, vector<32x16xf32> -> vector<32x16xf32>
    %c0_28 = arith.constant 0 : index
    %c0_29 = arith.constant 0 : index
    %33 = vector.load %arg10[%c0_28, %c0_29] : memref<1x16xf32, #tpu.memory_space<vmem>>, vector<1x16xf32>
    %34 = vector.broadcast %33 : vector<1x16xf32> to vector<32x16xf32>
    %35 = arith.addf %32, %34 : vector<32x16xf32>
    %c0_30 = arith.constant 0 : index
    %c0_31 = arith.constant 0 : index
    %36 = vector.load %arg12[%c0_30, %c0_31] : memref<32x16xf32, #tpu.memory_space<vmem>>, vector<32x16xf32>
    tpu.vector_store %arg12[%c0_30, %c0_31], %35 {strides = array<i32>} : memref<32x16xf32, #tpu.memory_space<vmem>>, vector<32x16xf32>,
    return
  }
  func.func @transform_0(%arg0: i32) -> (i32, i32) {
    %c0_i32 = arith.constant 0 : i32
    %c0_i32_0 = arith.constant 0 : i32
    return %arg0, %c0_i32 : i32, i32
  }
  func.func @transform_1(%arg0: i32) -> (i32, i32) {
    %c0_i32 = arith.constant 0 : i32
    %c0_i32_0 = arith.constant 0 : i32
    %c0_i32_1 = arith.constant 0 : i32
    return %c0_i32, %c0_i32_0 : i32, i32
  }
  func.func @transform_2(%arg0: i32) -> (i32, i32) {
    %c0_i32 = arith.constant 0 : i32
    %c0_i32_0 = arith.constant 0 : i32
    %c0_i32_1 = arith.constant 0 : i32
    return %c0_i32, %c0_i32_0 : i32, i32
  }
  func.func @transform_3(%arg0: i32) -> (i32, i32) {
    %c0_i32 = arith.constant 0 : i32
    %c0_i32_0 = arith.constant 0 : i32
    %c0_i32_1 = arith.constant 0 : i32
    return %c0_i32, %c0_i32_0 : i32, i32
  }
  func.func @transform_4(%arg0: i32) -> (i32, i32) {
    %c0_i32 = arith.constant 0 : i32
    %c0_i32_0 = arith.constant 0 : i32
    %c0_i32_1 = arith.constant 0 : i32
    return %c0_i32, %c0_i32_0 : i32, i32
  }
  func.func @transform_5(%arg0: i32) -> (i32, i32) {
    %c0_i32 = arith.constant 0 : i32
    %c0_i32_0 = arith.constant 0 : i32
    %c0_i32_1 = arith.constant 0 : i32
    return %c0_i32, %c0_i32_0 : i32, i32
  }
  func.func @transform_6(%arg0: i32) -> (i32, i32) {
    %c0_i32 = arith.constant 0 : i32
    %c0_i32_0 = arith.constant 0 : i32
    %c0_i32_1 = arith.constant 0 : i32
    return %c0_i32, %c0_i32_0 : i32, i32
  }
  func.func @transform_7(%arg0: i32) -> (i32, i32) {
    %c0_i32 = arith.constant 0 : i32
    %c0_i32_0 = arith.constant 0 : i32
    %c0_i32_1 = arith.constant 0 : i32
    return %c0_i32, %c0_i32_0 : i32, i32
  }
  func.func @transform_8(%arg0: i32) -> (i32, i32) {
    %c0_i32 = arith.constant 0 : i32
    %c0_i32_0 = arith.constant 0 : i32
    %c0_i32_1 = arith.constant 0 : i32
    return %c0_i32, %c0_i32_0 : i32, i32
  }
  func.func @transform_9(%arg0: i32) -> (i32, i32) {
    %c0_i32 = arith.constant 0 : i32
    %c0_i32_0 = arith.constant 0 : i32
    %c0_i32_1 = arith.constant 0 : i32
    return %c0_i32, %c0_i32_0 : i32, i32
  }
  func.func @transform_10(%arg0: i32) -> (i32, i32) {
    %c0_i32 = arith.constant 0 : i32
    %c0_i32_0 = arith.constant 0 : i32
    return %arg0, %c0_i32 : i32, i32
  }
  func.func @transform_11(%arg0: i32) -> (i32, i32) {
    %c0_i32 = arith.constant 0 : i32
    %c0_i32_0 = arith.constant 0 : i32
    return %arg0, %c0_i32 : i32, i32
  }
}

</mosaic_0001>

<llo_original>
// kernel: tpu_custom_call.1
$region0: #{tpu_custom_call.1}
  #allocation0 [shape = 'u32[]', space=smem, size = 0x4, offset = 0x4, fixed_abs, tag = 'smem constant byte address 0x4 - core index']
  #allocation1 [shape = 'u32[144,128]{1,0:T(1,128)}', space=vmem, size = 0x12000, scoped, tag = 'internal scratch']
  %s0 = inlined_call_operand.vmem [shape: f32[16,256], index: 0, kind: input, shape index: {}]
  %s1 = inlined_call_operand.vmem [shape: f32[256,16], index: 1, kind: input, shape index: {}]
  %s2 = inlined_call_operand.vmem [shape: f32[8,32], index: 2, kind: input, shape index: {}]
  %s3 = inlined_call_operand.vmem [shape: f32[1,32], index: 3, kind: input, shape index: {}]
  %s4 = inlined_call_operand.vmem [shape: f32[32,16], index: 4, kind: input, shape index: {}]
  %s5 = inlined_call_operand.vmem [shape: f32[1,16], index: 5, kind: input, shape index: {}]
  %s6 = inlined_call_operand.vmem [shape: f32[8,32], index: 6, kind: input, shape index: {}]
  %s7 = inlined_call_operand.vmem [shape: f32[1,32], index: 7, kind: input, shape index: {}]
  %s8 = inlined_call_operand.vmem [shape: f32[32,16], index: 8, kind: input, shape index: {}]
  %s9 = inlined_call_operand.vmem [shape: f32[1,16], index: 9, kind: input, shape index: {}]
  %s10 = inlined_call_operand.hbm [shape: f32[2,16], index: 10, kind: output, shape index: {0}]
  %s11 = inlined_call_operand.vmem [shape: f32[32,16], index: 11, kind: output, shape index: {1}]
  %12 = xla_tuple %s10, %s11
  %s13 = sld [smem:[#allocation0]]
  $region58: #{tpu_custom_call.1} parent=0
    _
  %s15 = ssub.s32 1, %s13
  %s16 = scalar_select 0, %s15, %s13
  $region1: #{tpu_custom_call.1} parent=0
    #allocation2 [shape = 'u8[1024]{0}', space=vmem, size = 0x400, scoped, tag = 'output window, operand 0, single buffered']
    #allocation3 [shape = 's32[1]{0}', space=sflag, size = 0x4, scoped, tag = 'scoped memory for tpu_custom_call.1']
    %17 = vsyncpa [#allocation3], 0
    // Predicated region
    $region2: #{tpu_custom_call.1} parent=1 // pred_check
      _
    $region3: #{tpu_custom_call.1} parent=1 // pred_check_branch
      %19 = sbr.rel (0) target = $region5
    $region4: #{tpu_custom_call.1} parent=1 // pred_region
      _
    $region5: #{tpu_custom_call.1} parent=1 // pred_fallthru
      _
    // Predicated region
    $region6: #{tpu_custom_call.1} parent=1 // pred_check
      _
    $region7: #{tpu_custom_call.1} parent=1 // pred_check_branch
      %21 = sbr.rel (0) target = $region9
    $region8: #{tpu_custom_call.1} parent=1 // pred_region
      _
    $region9: #{tpu_custom_call.1} parent=1 // pred_fallthru
      _
    // Predicated region
    $region10: #{tpu_custom_call.1} parent=1 // pred_check
      _
    $region11: #{tpu_custom_call.1} parent=1 // pred_check_branch
      %23 = sbr.rel (0) target = $region13
    $region12: #{tpu_custom_call.1} parent=1 // pred_region
      _
    $region13: #{tpu_custom_call.1} parent=1 // pred_fallthru
      _
    // Predicated region
    $region14: #{tpu_custom_call.1} parent=1 // pred_check
      _
    $region15: #{tpu_custom_call.1} parent=1 // pred_check_branch
      %25 = sbr.rel (0) target = $region17
    $region16: #{tpu_custom_call.1} parent=1 // pred_region
      _
    $region17: #{tpu_custom_call.1} parent=1 // pred_fallthru
      _
    // Predicated region
    $region18: #{tpu_custom_call.1} parent=1 // pred_check
      _
    $region19: #{tpu_custom_call.1} parent=1 // pred_check_branch
      %27 = sbr.rel (0) target = $region21
    $region20: #{tpu_custom_call.1} parent=1 // pred_region
      _
    $region21: #{tpu_custom_call.1} parent=1 // pred_fallthru
      _
    // Predicated region
    $region22: #{tpu_custom_call.1} parent=1 // pred_check
      _
    $region23: #{tpu_custom_call.1} parent=1 // pred_check_branch
      %29 = sbr.rel (0) target = $region25
    $region24: #{tpu_custom_call.1} parent=1 // pred_region
      _
    $region25: #{tpu_custom_call.1} parent=1 // pred_fallthru
      _
    // Predicated region
    $region26: #{tpu_custom_call.1} parent=1 // pred_check
      _
    $region27: #{tpu_custom_call.1} parent=1 // pred_check_branch
      %31 = sbr.rel (0) target = $region29
    $region28: #{tpu_custom_call.1} parent=1 // pred_region
      _
    $region29: #{tpu_custom_call.1} parent=1 // pred_fallthru
      _
    // Predicated region
    $region30: #{tpu_custom_call.1} parent=1 // pred_check
      _
    $region31: #{tpu_custom_call.1} parent=1 // pred_check_branch
      %33 = sbr.rel (0) target = $region33
    $region32: #{tpu_custom_call.1} parent=1 // pred_region
      _
    $region33: #{tpu_custom_call.1} parent=1 // pred_fallthru
      _
    // Predicated region
    $region34: #{tpu_custom_call.1} parent=1 // pred_check
      _
    $region35: #{tpu_custom_call.1} parent=1 // pred_check_branch
      %35 = sbr.rel (0) target = $region37
    $region36: #{tpu_custom_call.1} parent=1 // pred_region
      _
    $region37: #{tpu_custom_call.1} parent=1 // pred_fallthru
      _
    // Predicated region
    $region38: #{tpu_custom_call.1} parent=1 // pred_check
      _
    $region39: #{tpu_custom_call.1} parent=1 // pred_check_branch
      %37 = sbr.rel (0) target = $region41
    $region40: #{tpu_custom_call.1} parent=1 // pred_region
      _
    $region41: #{tpu_custom_call.1} parent=1 // pred_fallthru
      _
    %v38 = vld [vmem:[%s0] sm:$0xff]
    %v39 = vld [vmem:[%s0 + $0x8] sm:$0xff]
    %v40 = vld [vmem:[%s0 + $0x10] sm:$0xff]
    %v41 = vld [vmem:[%s0 + $0x18] sm:$0xff]
    %v42 = vld [vmem:[%s1] sm:$0xff]
    %v43 = vld [vmem:[%s1 + $0x8] sm:$0xff]
    %v44 = vld [vmem:[%s1 + $0x10] sm:$0xff]
    %v45 = vld [vmem:[%s1 + $0x18] sm:$0xff]
    %v46 = vld [vmem:[%s1 + $0x20] sm:$0xff]
    %v47 = vld [vmem:[%s1 + $0x28] sm:$0xff]
    %v48 = vld [vmem:[%s1 + $0x30] sm:$0xff]
    %v49 = vld [vmem:[%s1 + $0x38] sm:$0xff]
    %v50 = vld [vmem:[%s1 + $0x40] sm:$0xff]
    %v51 = vld [vmem:[%s1 + $0x48] sm:$0xff]
    %v52 = vld [vmem:[%s1 + $0x50] sm:$0xff]
    %v53 = vld [vmem:[%s1 + $0x58] sm:$0xff]
    %v54 = vld [vmem:[%s1 + $0x60] sm:$0xff]
    %v55 = vld [vmem:[%s1 + $0x68] sm:$0xff]
    %v56 = vld [vmem:[%s1 + $0x70] sm:$0xff]
    %v57 = vld [vmem:[%s1 + $0x78] sm:$0xff]
    %v58 = vld [vmem:[%s1 + $0x80] sm:$0xff]
    %v59 = vld [vmem:[%s1 + $0x88] sm:$0xff]
    %v60 = vld [vmem:[%s1 + $0x90] sm:$0xff]
    %v61 = vld [vmem:[%s1 + $0x98] sm:$0xff]
    %v62 = vld [vmem:[%s1 + $0xa0] sm:$0xff]
    %v63 = vld [vmem:[%s1 + $0xa8] sm:$0xff]
    %v64 = vld [vmem:[%s1 + $0xb0] sm:$0xff]
    %v65 = vld [vmem:[%s1 + $0xb8] sm:$0xff]
    %v66 = vld [vmem:[%s1 + $0xc0] sm:$0xff]
    %v67 = vld [vmem:[%s1 + $0xc8] sm:$0xff]
    %v68 = vld [vmem:[%s1 + $0xd0] sm:$0xff]
    %v69 = vld [vmem:[%s1 + $0xd8] sm:$0xff]
    %v70 = vld [vmem:[%s1 + $0xe0] sm:$0xff]
    %v71 = vld [vmem:[%s1 + $0xe8] sm:$0xff]
    %v72 = vld [vmem:[%s1 + $0xf0] sm:$0xff]
    %v73 = vld [vmem:[%s1 + $0xf8] sm:$0xff]
    %74 = vmatprep.subr.mxu0 0.0
    %75 = vmatpush1.msra.mxu0 %v57
    %76 = vmatprep.subr.mxu0 0.0
    %77 = vmatpush1.msra.mxu0 %v56
    %78 = vmatprep.subr.mxu0 0.0
    %79 = vmatpush1.msra.mxu0 %v55
    %80 = vmatprep.subr.mxu0 0.0
    %81 = vmatpush1.msra.mxu0 %v54
    %82 = vmatprep.subr.mxu0 0.0
    %83 = vmatpush1.msra.mxu0 %v53
    %84 = vmatprep.subr.mxu0 0.0
    %85 = vmatpush1.msra.mxu0 %v52
    %86 = vmatprep.subr.mxu0 0.0
    %87 = vmatpush1.msra.mxu0 %v51
    %88 = vmatprep.subr.mxu0 0.0
    %89 = vmatpush1.msra.mxu0 %v50
    %90 = vmatprep.subr.mxu0 0.0
    %91 = vmatpush1.msra.mxu0 %v49
    %92 = vmatprep.subr.mxu0 0.0
    %93 = vmatpush1.msra.mxu0 %v48
    %94 = vmatprep.subr.mxu0 0.0
    %95 = vmatpush1.msra.mxu0 %v47
    %96 = vmatprep.subr.mxu0 0.0
    %97 = vmatpush1.msra.mxu0 %v46
    %98 = vmatprep.subr.mxu0 0.0
    %99 = vmatpush1.msra.mxu0 %v45
    %100 = vmatprep.subr.mxu0 0.0
    %101 = vmatpush1.msra.mxu0 %v44
    %102 = vmatprep.subr.mxu0 0.0
    %103 = vmatpush1.msra.mxu0 %v43
    %104 = vmatprep.subr.mxu0 0.0
    %105 = vmatpush1.msra.mxu0 %v42
    %106 = vmatprep.subr.mxu0 0.0
    %107 = vmatpush2.msra.mxu0 %v73
    %108 = vmatprep.subr.mxu0 0.0
    %109 = vmatpush2.msra.mxu0 %v72
    %110 = vmatprep.subr.mxu0 0.0
    %111 = vmatpush2.msra.mxu0 %v71
    %112 = vmatprep.subr.mxu0 0.0
    %113 = vmatpush2.msra.mxu0 %v70
    %114 = vmatprep.subr.mxu0 0.0
    %115 = vmatpush2.msra.mxu0 %v69
    %116 = vmatprep.subr.mxu0 0.0
    %117 = vmatpush2.msra.mxu0 %v68
    %118 = vmatprep.subr.mxu0 0.0
    %119 = vmatpush2.msra.mxu0 %v67
    %120 = vmatprep.subr.mxu0 0.0
    %121 = vmatpush2.msra.mxu0 %v66
    %122 = vmatprep.subr.mxu0 0.0
    %123 = vmatpush2.msra.mxu0 %v65
    %124 = vmatprep.subr.mxu0 0.0
    %125 = vmatpush2.msra.mxu0 %v64
    %126 = vmatprep.subr.mxu0 0.0
    %127 = vmatpush2.msra.mxu0 %v63
    %128 = vmatprep.subr.mxu0 0.0
    %129 = vmatpush2.msra.mxu0 %v62
    %130 = vmatprep.subr.mxu0 0.0
    %131 = vmatpush2.msra.mxu0 %v61
    %132 = vmatprep.subr.mxu0 0.0
    %133 = vmatpush2.msra.mxu0 %v60
    %134 = vmatprep.subr.mxu0 0.0
    %135 = vmatpush2.msra.mxu0 %v59
    %136 = vmatprep.subr.mxu0 0.0
    %137 = vmatpush2.msra.mxu0 %v58
    %138 = vmatprep.mubr.f32.mxu0 %v39
    %139 = vmatmul.mubr.f32.gmra.mxu0 %v38
    %v140 = vpop.f32.mrf.mxu0
    %v141 = vadd.f32 0.0, %v140
    %v142 = vpop.f32.mrf.mxu0
    %143 = vmatprep.mubr.f32.mxu0 %v41
    %144 = vmatmul.mubr.f32.gmra.mxu0 %v40
    %v145 = vpop.f32.mrf.mxu0
    %v146 = vadd.f32 0.0, %v145
    %v147 = vpop.f32.mrf.mxu0
    %148 = vdwg.mxu0
    %v149 = vmul.f32 %v141, 0.0625
    %v150 = vmul.f32 %v146, 0.0625
    %vm151 = vcmask 130048
    %v152 = vsel %vm151, %v149, 0.0
    %153 = vadd.xlane.f32.xlu0 %v152
    %v154 = vpop.xlane.xlu0 %153
    %v155 = vsel %vm151, %v150, 0.0
    %156 = vadd.xlane.f32.xlu0 %v155
    %v157 = vpop.xlane.xlu0 %156
    %v158 = vrcp.pop 16.0
    %v159 = vmul.f32 %v154, %v158
    %v160 = vmul.f32 %v157, %v158
    %v161 = vld [vmem:[%s2] sm:$0xff]
    %v162 = vld [vmem:[%s3] sm:$0x1]
    %v164 = vlaneseq
    %v165 = vshrl.u32 %v164, 7
    %v166 = vsub.s32 0, %v165
    %v167 = vrot.slane %v162, %v166
    %v171 = vlaneseq
    %v172 = vand.u32 %v171, 127
    %v173 = vlaneseq
    %v174 = vshrl.u32 %v173, 7
    %v175 = vsub.s32 %v172, %v174
    %v176 = vrot.slane %v159, %v175
    %v177 = vlaneseq
    %v178 = vshrl.u32 %v177, 7
    %v179 = vsub.s32 %v172, %v178
    %v180 = vrot.slane %v160, %v179
    %vm181 = vcmask 1041409
    %v182 = vsel %vm181, %v180, %v176
    %vm183 = vcmask 64512
    %v184 = vsel %vm183, %v182, 0
    %186 = vmatprep.subr.mxu0 0.0
    %187 = vmatpush1.msra.mxu0 0.0
    %188 = vmatprep.subr.mxu0 0.0
    %189 = vmatpush1.msra.mxu0 0.0
    %190 = vmatprep.subr.mxu0 0.0
    %191 = vmatpush1.msra.mxu0 0.0
    %192 = vmatprep.subr.mxu0 0.0
    %193 = vmatpush1.msra.mxu0 0.0
    %194 = vmatprep.subr.mxu0 0.0
    %195 = vmatpush1.msra.mxu0 0.0
    %196 = vmatprep.subr.mxu0 0.0
    %197 = vmatpush1.msra.mxu0 0.0
    %198 = vmatprep.subr.mxu0 0.0
    %199 = vmatpush1.msra.mxu0 0.0
    %200 = vmatprep.subr.mxu0 0.0
    %201 = vmatpush1.msra.mxu0 0.0
    %202 = vmatprep.subr.mxu0 0.0
    %203 = vmatpush1.msra.mxu0 0.0
    %204 = vmatprep.subr.mxu0 0.0
    %205 = vmatpush1.msra.mxu0 0.0
    %206 = vmatprep.subr.mxu0 0.0
    %207 = vmatpush1.msra.mxu0 0.0
    %208 = vmatprep.subr.mxu0 0.0
    %209 = vmatpush1.msra.mxu0 0.0
    %210 = vmatprep.subr.mxu0 0.0
    %211 = vmatpush1.msra.mxu0 0.0
    %212 = vmatprep.subr.mxu0 0.0
    %213 = vmatpush1.msra.mxu0 0.0
    %214 = vmatprep.subr.mxu0 0.0
    %215 = vmatpush1.msra.mxu0 0.0
    %216 = vmatprep.subr.mxu0 0.0
    %217 = vmatpush1.msra.mxu0 %v161
    %218 = vmatprep.subr.mxu0 0.0
    %219 = vmatpush2.msra.mxu0 0.0
    %220 = vmatprep.subr.mxu0 0.0
    %221 = vmatpush2.msra.mxu0 0.0
    %222 = vmatprep.subr.mxu0 0.0
    %223 = vmatpush2.msra.mxu0 0.0
    %224 = vmatprep.subr.mxu0 0.0
    %225 = vmatpush2.msra.mxu0 0.0
    %226 = vmatprep.subr.mxu0 0.0
    %227 = vmatpush2.msra.mxu0 0.0
    %228 = vmatprep.subr.mxu0 0.0
    %229 = vmatpush2.msra.mxu0 0.0
    %230 = vmatprep.subr.mxu0 0.0
    %231 = vmatpush2.msra.mxu0 0.0
    %232 = vmatprep.subr.mxu0 0.0
    %233 = vmatpush2.msra.mxu0 0.0
    %234 = vmatprep.subr.mxu0 0.0
    %235 = vmatpush2.msra.mxu0 0.0
    %236 = vmatprep.subr.mxu0 0.0
    %237 = vmatpush2.msra.mxu0 0.0
    %238 = vmatprep.subr.mxu0 0.0
    %239 = vmatpush2.msra.mxu0 0.0
    %240 = vmatprep.subr.mxu0 0.0
    %241 = vmatpush2.msra.mxu0 0.0
    %242 = vmatprep.subr.mxu0 0.0
    %243 = vmatpush2.msra.mxu0 0.0
    %244 = vmatprep.subr.mxu0 0.0
    %245 = vmatpush2.msra.mxu0 0.0
    %246 = vmatprep.subr.mxu0 0.0
    %247 = vmatpush2.msra.mxu0 0.0
    %248 = vmatprep.subr.mxu0 0.0
    %249 = vmatpush2.msra.mxu0 0.0
    %250 = vmatprep.mubr.f32.mxu0 0.0
    %251 = vmatmul.mubr.f32.gmra.mxu0 %v184
    %v252 = vpop.f32.mrf.mxu0
    %v253 = vadd.f32 %v167, %v252
    %v254 = vpop.f32.mrf.mxu0
    %255 = vdwg.mxu0
    %v256 = vmax.f32 %v253, 0.0
    %v257 = vld [vmem:[%s4] sm:$0xff]
    %v258 = vld [vmem:[%s4 + $0x8] sm:$0xff]
    %v259 = vld [vmem:[%s4 + $0x10] sm:$0xff]
    %v260 = vld [vmem:[%s4 + $0x18] sm:$0xff]
    %v261 = vld [vmem:[%s5] sm:$0x1]
    %v263 = vlaneseq
    %v264 = vshrl.u32 %v263, 7
    %v265 = vsub.s32 0, %v264
    %v266 = vrot.slane %v261, %v265
    %vm268 = vcmask 261120
    %v270 = vsel %vm268, %v256, 0
    %272 = vmatprep.subr.mxu0 0.0
    %273 = vmatpush1.msra.mxu0 0.0
    %274 = vmatprep.subr.mxu0 0.0
    %275 = vmatpush1.msra.mxu0 0.0
    %276 = vmatprep.subr.mxu0 0.0
    %277 = vmatpush1.msra.mxu0 0.0
    %278 = vmatprep.subr.mxu0 0.0
    %279 = vmatpush1.msra.mxu0 0.0
    %280 = vmatprep.subr.mxu0 0.0
    %281 = vmatpush1.msra.mxu0 0.0
    %282 = vmatprep.subr.mxu0 0.0
    %283 = vmatpush1.msra.mxu0 0.0
    %284 = vmatprep.subr.mxu0 0.0
    %285 = vmatpush1.msra.mxu0 0.0
    %286 = vmatprep.subr.mxu0 0.0
    %287 = vmatpush1.msra.mxu0 0.0
    %288 = vmatprep.subr.mxu0 0.0
    %289 = vmatpush1.msra.mxu0 0.0
    %290 = vmatprep.subr.mxu0 0.0
    %291 = vmatpush1.msra.mxu0 0.0
    %292 = vmatprep.subr.mxu0 0.0
    %293 = vmatpush1.msra.mxu0 0.0
    %294 = vmatprep.subr.mxu0 0.0
    %295 = vmatpush1.msra.mxu0 0.0
    %296 = vmatprep.subr.mxu0 0.0
    %297 = vmatpush1.msra.mxu0 %v260
    %298 = vmatprep.subr.mxu0 0.0
    %299 = vmatpush1.msra.mxu0 %v259
    %300 = vmatprep.subr.mxu0 0.0
    %301 = vmatpush1.msra.mxu0 %v258
    %302 = vmatprep.subr.mxu0 0.0
    %303 = vmatpush1.msra.mxu0 %v257
    %304 = vmatprep.subr.mxu0 0.0
    %305 = vmatpush2.msra.mxu0 0.0
    %306 = vmatprep.subr.mxu0 0.0
    %307 = vmatpush2.msra.mxu0 0.0
    %308 = vmatprep.subr.mxu0 0.0
    %309 = vmatpush2.msra.mxu0 0.0
    %310 = vmatprep.subr.mxu0 0.0
    %311 = vmatpush2.msra.mxu0 0.0
    %312 = vmatprep.subr.mxu0 0.0
    %313 = vmatpush2.msra.mxu0 0.0
    %314 = vmatprep.subr.mxu0 0.0
    %315 = vmatpush2.msra.mxu0 0.0
    %316 = vmatprep.subr.mxu0 0.0
    %317 = vmatpush2.msra.mxu0 0.0
    %318 = vmatprep.subr.mxu0 0.0
    %319 = vmatpush2.msra.mxu0 0.0
    %320 = vmatprep.subr.mxu0 0.0
    %321 = vmatpush2.msra.mxu0 0.0
    %322 = vmatprep.subr.mxu0 0.0
    %323 = vmatpush2.msra.mxu0 0.0
    %324 = vmatprep.subr.mxu0 0.0
    %325 = vmatpush2.msra.mxu0 0.0
    %326 = vmatprep.subr.mxu0 0.0
    %327 = vmatpush2.msra.mxu0 0.0
    %328 = vmatprep.subr.mxu0 0.0
    %329 = vmatpush2.msra.mxu0 0.0
    %330 = vmatprep.subr.mxu0 0.0
    %331 = vmatpush2.msra.mxu0 0.0
    %332 = vmatprep.subr.mxu0 0.0
    %333 = vmatpush2.msra.mxu0 0.0
    %334 = vmatprep.subr.mxu0 0.0
    %335 = vmatpush2.msra.mxu0 0.0
    %336 = vmatprep.mubr.f32.mxu0 0.0
    %337 = vmatmul.mubr.f32.gmra.mxu0 %v270
    %v338 = vpop.f32.mrf.mxu0
    %v339 = vadd.f32 %v266, %v338
    %v340 = vpop.f32.mrf.mxu0
    %341 = vdwg.mxu0
    %vm342 = vcmask 123904
    %343 = vst.msk [vmem:[#allocation2] sm:$0x3] %vm342, %v339
    %344 = vxpose.xlu0.b32.start [1/16] %v149, 128
    %345 = vxpose.xlu0.b32.cont [2/16] 0.0, 128
    %346 = vxpose.xlu0.b32.cont [3/16] 0.0, 128
    %347 = vxpose.xlu0.b32.cont [4/16] 0.0, 128
    %348 = vxpose.xlu0.b32.cont [5/16] 0.0, 128
    %349 = vxpose.xlu0.b32.cont [6/16] 0.0, 128
    %350 = vxpose.xlu0.b32.cont [7/16] 0.0, 128
    %351 = vxpose.xlu0.b32.cont [8/16] 0.0, 128
    %352 = vxpose.xlu0.b32.cont [9/16] 0.0, 128
    %353 = vxpose.xlu0.b32.cont [10/16] 0.0, 128
    %354 = vxpose.xlu0.b32.cont [11/16] 0.0, 128
    %355 = vxpose.xlu0.b32.cont [12/16] 0.0, 128
    %356 = vxpose.xlu0.b32.cont [13/16] 0.0, 128
    %357 = vxpose.xlu0.b32.cont [14/16] 0.0, 128
    %358 = vxpose.xlu0.b32.cont [15/16] 0.0, 128
    %359 = vxpose.xlu0.b32.end [16/16] 0.0, 128
    %v360 = vpop.trf.xlu0
    %v361 = vpop.trf.xlu0
    %v362 = vpop.trf.xlu0
    %v363 = vpop.trf.xlu0
    %v364 = vpop.trf.xlu0
    %v365 = vpop.trf.xlu0
    %v366 = vpop.trf.xlu0
    %v367 = vpop.trf.xlu0
    %v368 = vpop.trf.xlu0
    %v369 = vpop.trf.xlu0
    %v370 = vpop.trf.xlu0
    %v371 = vpop.trf.xlu0
    %v372 = vpop.trf.xlu0
    %v373 = vpop.trf.xlu0
    %v374 = vpop.trf.xlu0
    %v375 = vpop.trf.xlu0
    %376 = vxpose.xlu0.b32.start [1/16] %v150, 128
    %377 = vxpose.xlu0.b32.cont [2/16] 0.0, 128
    %378 = vxpose.xlu0.b32.cont [3/16] 0.0, 128
    %379 = vxpose.xlu0.b32.cont [4/16] 0.0, 128
    %380 = vxpose.xlu0.b32.cont [5/16] 0.0, 128
    %381 = vxpose.xlu0.b32.cont [6/16] 0.0, 128
    %382 = vxpose.xlu0.b32.cont [7/16] 0.0, 128
    %383 = vxpose.xlu0.b32.cont [8/16] 0.0, 128
    %384 = vxpose.xlu0.b32.cont [9/16] 0.0, 128
    %385 = vxpose.xlu0.b32.cont [10/16] 0.0, 128
    %386 = vxpose.xlu0.b32.cont [11/16] 0.0, 128
    %387 = vxpose.xlu0.b32.cont [12/16] 0.0, 128
    %388 = vxpose.xlu0.b32.cont [13/16] 0.0, 128
    %389 = vxpose.xlu0.b32.cont [14/16] 0.0, 128
    %390 = vxpose.xlu0.b32.cont [15/16] 0.0, 128
    %391 = vxpose.xlu0.b32.end [16/16] 0.0, 128
    %v392 = vpop.trf.xlu0
    %v393 = vpop.trf.xlu0
    %v394 = vpop.trf.xlu0
    %v395 = vpop.trf.xlu0
    %v396 = vpop.trf.xlu0
    %v397 = vpop.trf.xlu0
    %v398 = vpop.trf.xlu0
    %v399 = vpop.trf.xlu0
    %v400 = vpop.trf.xlu0
    %v401 = vpop.trf.xlu0
    %v402 = vpop.trf.xlu0
    %v403 = vpop.trf.xlu0
    %v404 = vpop.trf.xlu0
    %v405 = vpop.trf.xlu0
    %v406 = vpop.trf.xlu0
    %v407 = vpop.trf.xlu0
    %v408 = vld [vmem:[%s6] sm:$0xff]
    %v409 = vld [vmem:[%s7] sm:$0x1]
    %v411 = vlaneseq
    %v412 = vshrl.u32 %v411, 7
    %v413 = vsub.s32 0, %v412
    %v414 = vrot.slane %v409, %v413
    %v417 = vsel %vm183, %v360, 0
    %v420 = vsel %vm183, %v361, 0
    %v423 = vsel %vm183, %v392, 0
    %v426 = vsel %vm183, %v393, 0
    %428 = vmatprep.subr.mxu0 0.0
    %429 = vmatpush1.msra.mxu0 0.0
    %430 = vmatprep.subr.mxu0 0.0
    %431 = vmatpush1.msra.mxu0 0.0
    %432 = vmatprep.subr.mxu0 0.0
    %433 = vmatpush1.msra.mxu0 0.0
    %434 = vmatprep.subr.mxu0 0.0
    %435 = vmatpush1.msra.mxu0 0.0
    %436 = vmatprep.subr.mxu0 0.0
    %437 = vmatpush1.msra.mxu0 0.0
    %438 = vmatprep.subr.mxu0 0.0
    %439 = vmatpush1.msra.mxu0 0.0
    %440 = vmatprep.subr.mxu0 0.0
    %441 = vmatpush1.msra.mxu0 0.0
    %442 = vmatprep.subr.mxu0 0.0
    %443 = vmatpush1.msra.mxu0 0.0
    %444 = vmatprep.subr.mxu0 0.0
    %445 = vmatpush1.msra.mxu0 0.0
    %446 = vmatprep.subr.mxu0 0.0
    %447 = vmatpush1.msra.mxu0 0.0
    %448 = vmatprep.subr.mxu0 0.0
    %449 = vmatpush1.msra.mxu0 0.0
    %450 = vmatprep.subr.mxu0 0.0
    %451 = vmatpush1.msra.mxu0 0.0
    %452 = vmatprep.subr.mxu0 0.0
    %453 = vmatpush1.msra.mxu0 0.0
    %454 = vmatprep.subr.mxu0 0.0
    %455 = vmatpush1.msra.mxu0 0.0
    %456 = vmatprep.subr.mxu0 0.0
    %457 = vmatpush1.msra.mxu0 0.0
    %458 = vmatprep.subr.mxu0 0.0
    %459 = vmatpush1.msra.mxu0 %v408
    %460 = vmatprep.subr.mxu0 0.0
    %461 = vmatpush2.msra.mxu0 0.0
    %462 = vmatprep.subr.mxu0 0.0
    %463 = vmatpush2.msra.mxu0 0.0
    %464 = vmatprep.subr.mxu0 0.0
    %465 = vmatpush2.msra.mxu0 0.0
    %466 = vmatprep.subr.mxu0 0.0
    %467 = vmatpush2.msra.mxu0 0.0
    %468 = vmatprep.subr.mxu0 0.0
    %469 = vmatpush2.msra.mxu0 0.0
    %470 = vmatprep.subr.mxu0 0.0
    %471 = vmatpush2.msra.mxu0 0.0
    %472 = vmatprep.subr.mxu0 0.0
    %473 = vmatpush2.msra.mxu0 0.0
    %474 = vmatprep.subr.mxu0 0.0
    %475 = vmatpush2.msra.mxu0 0.0
    %476 = vmatprep.subr.mxu0 0.0
    %477 = vmatpush2.msra.mxu0 0.0
    %478 = vmatprep.subr.mxu0 0.0
    %479 = vmatpush2.msra.mxu0 0.0
    %480 = vmatprep.subr.mxu0 0.0
    %481 = vmatpush2.msra.mxu0 0.0
    %482 = vmatprep.subr.mxu0 0.0
    %483 = vmatpush2.msra.mxu0 0.0
    %484 = vmatprep.subr.mxu0 0.0
    %485 = vmatpush2.msra.mxu0 0.0
    %486 = vmatprep.subr.mxu0 0.0
    %487 = vmatpush2.msra.mxu0 0.0
    %488 = vmatprep.subr.mxu0 0.0
    %489 = vmatpush2.msra.mxu0 0.0
    %490 = vmatprep.subr.mxu0 0.0
    %491 = vmatpush2.msra.mxu0 0.0
    %492 = vmatprep.mubr.f32.mxu0 0.0
    %493 = vmatmul.mubr.f32.gmra.mxu0 %v417
    %v494 = vpop.f32.mrf.mxu0
    %v495 = vadd.f32 %v414, %v494
    %v496 = vpop.f32.mrf.mxu0
    %497 = vmatprep.mubr.f32.mxu0 0.0
    %498 = vmatmul.mubr.f32.gmra.mxu0 %v420
    %v499 = vpop.f32.mrf.mxu0
    %v500 = vadd.f32 %v414, %v499
    %v501 = vpop.f32.mrf.mxu0
    %502 = vmatprep.mubr.f32.mxu0 0.0
    %503 = vmatmul.mubr.f32.gmra.mxu0 %v423
    %v504 = vpop.f32.mrf.mxu0
    %v505 = vadd.f32 %v414, %v504
    %v506 = vpop.f32.mrf.mxu0
    %507 = vmatprep.mubr.f32.mxu0 0.0
    %508 = vmatmul.mubr.f32.gmra.mxu0 %v426
    %v509 = vpop.f32.mrf.mxu0
    %v510 = vadd.f32 %v414, %v509
    %v511 = vpop.f32.mrf.mxu0
    %512 = vdwg.mxu0
    %v513 = vmax.f32 %v495, 0.0
    %v514 = vmax.f32 %v500, 0.0
    %v515 = vmax.f32 %v505, 0.0
    %v516 = vmax.f32 %v510, 0.0
    %v517 = vld [vmem:[%s8] sm:$0xff]
    %v518 = vld [vmem:[%s8 + $0x8] sm:$0xff]
    %v519 = vld [vmem:[%s8 + $0x10] sm:$0xff]
    %v520 = vld [vmem:[%s8 + $0x18] sm:$0xff]
    %v521 = vld [vmem:[%s9] sm:$0x1]
    %v523 = vlaneseq
    %v524 = vshrl.u32 %v523, 7
    %v525 = vsub.s32 0, %v524
    %v526 = vrot.slane %v521, %v525
    %v529 = vsel %vm268, %v513, 0
    %v532 = vsel %vm268, %v514, 0
    %v535 = vsel %vm268, %v515, 0
    %v538 = vsel %vm268, %v516, 0
    %540 = vmatprep.subr.mxu0 0.0
    %541 = vmatpush1.msra.mxu0 0.0
    %542 = vmatprep.subr.mxu0 0.0
    %543 = vmatpush1.msra.mxu0 0.0
    %544 = vmatprep.subr.mxu0 0.0
    %545 = vmatpush1.msra.mxu0 0.0
    %546 = vmatprep.subr.mxu0 0.0
    %547 = vmatpush1.msra.mxu0 0.0
    %548 = vmatprep.subr.mxu0 0.0
    %549 = vmatpush1.msra.mxu0 0.0
    %550 = vmatprep.subr.mxu0 0.0
    %551 = vmatpush1.msra.mxu0 0.0
    %552 = vmatprep.subr.mxu0 0.0
    %553 = vmatpush1.msra.mxu0 0.0
    %554 = vmatprep.subr.mxu0 0.0
    %555 = vmatpush1.msra.mxu0 0.0
    %556 = vmatprep.subr.mxu0 0.0
    %557 = vmatpush1.msra.mxu0 0.0
    %558 = vmatprep.subr.mxu0 0.0
    %559 = vmatpush1.msra.mxu0 0.0
    %560 = vmatprep.subr.mxu0 0.0
    %561 = vmatpush1.msra.mxu0 0.0
    %562 = vmatprep.subr.mxu0 0.0
    %563 = vmatpush1.msra.mxu0 0.0
    %564 = vmatprep.subr.mxu0 0.0
    %565 = vmatpush1.msra.mxu0 %v520
    %566 = vmatprep.subr.mxu0 0.0
    %567 = vmatpush1.msra.mxu0 %v519
    %568 = vmatprep.subr.mxu0 0.0
    %569 = vmatpush1.msra.mxu0 %v518
    %570 = vmatprep.subr.mxu0 0.0
    %571 = vmatpush1.msra.mxu0 %v517
    %572 = vmatprep.subr.mxu0 0.0
    %573 = vmatpush2.msra.mxu0 0.0
    %574 = vmatprep.subr.mxu0 0.0
    %575 = vmatpush2.msra.mxu0 0.0
    %576 = vmatprep.subr.mxu0 0.0
    %577 = vmatpush2.msra.mxu0 0.0
    %578 = vmatprep.subr.mxu0 0.0
    %579 = vmatpush2.msra.mxu0 0.0
    %580 = vmatprep.subr.mxu0 0.0
    %581 = vmatpush2.msra.mxu0 0.0
    %582 = vmatprep.subr.mxu0 0.0
    %583 = vmatpush2.msra.mxu0 0.0
    %584 = vmatprep.subr.mxu0 0.0
    %585 = vmatpush2.msra.mxu0 0.0
    %586 = vmatprep.subr.mxu0 0.0
    %587 = vmatpush2.msra.mxu0 0.0
    %588 = vmatprep.subr.mxu0 0.0
    %589 = vmatpush2.msra.mxu0 0.0
    %590 = vmatprep.subr.mxu0 0.0
    %591 = vmatpush2.msra.mxu0 0.0
    %592 = vmatprep.subr.mxu0 0.0
    %593 = vmatpush2.msra.mxu0 0.0
    %594 = vmatprep.subr.mxu0 0.0
    %595 = vmatpush2.msra.mxu0 0.0
    %596 = vmatprep.subr.mxu0 0.0
    %597 = vmatpush2.msra.mxu0 0.0
    %598 = vmatprep.subr.mxu0 0.0
    %599 = vmatpush2.msra.mxu0 0.0
    %600 = vmatprep.subr.mxu0 0.0
    %601 = vmatpush2.msra.mxu0 0.0
    %602 = vmatprep.subr.mxu0 0.0
    %603 = vmatpush2.msra.mxu0 0.0
    %604 = vmatprep.mubr.f32.mxu0 0.0
    %605 = vmatmul.mubr.f32.gmra.mxu0 %v529
    %v606 = vpop.f32.mrf.mxu0
    %v607 = vadd.f32 %v526, %v606
    %v608 = vpop.f32.mrf.mxu0
    %609 = vmatprep.mubr.f32.mxu0 0.0
    %610 = vmatmul.mubr.f32.gmra.mxu0 %v532
    %v611 = vpop.f32.mrf.mxu0
    %v612 = vadd.f32 %v526, %v611
    %v613 = vpop.f32.mrf.mxu0
    %614 = vmatprep.mubr.f32.mxu0 0.0
    %615 = vmatmul.mubr.f32.gmra.mxu0 %v535
    %v616 = vpop.f32.mrf.mxu0
    %v617 = vadd.f32 %v526, %v616
    %v618 = vpop.f32.mrf.mxu0
    %619 = vmatprep.mubr.f32.mxu0 0.0
    %620 = vmatmul.mubr.f32.gmra.mxu0 %v538
    %v621 = vpop.f32.mrf.mxu0
    %v622 = vadd.f32 %v526, %v621
    %v623 = vpop.f32.mrf.mxu0
    %624 = vdwg.mxu0
    %625 = vst.msk [vmem:[%s11] sm:$0xff] %vm151, %v607
    %626 = vst.msk [vmem:[%s11 + $0x8] sm:$0xff] %vm151, %v612
    %627 = vst.msk [vmem:[%s11 + $0x10] sm:$0xff] %vm151, %v617
    %628 = vst.msk [vmem:[%s11 + $0x18] sm:$0xff] %vm151, %v622
    // Predicated region
    $region42: #{tpu_custom_call.1} parent=1 // pred_check
      _
    $region43: #{tpu_custom_call.1} parent=1 // pred_check_branch
      %630 = sbr.rel (0) target = $region45
    $region44: #{tpu_custom_call.1} parent=1 // pred_region
      %s632 = ssub.s32 32, 32
      %633 = vsyncadd [#allocation3], %s632
      %s635 = sshll.u32 [#allocation2], 4
      %s636 = int_to_ptr.vmem [resolvable:$true] %s635
      %638 = dma.vmem_to_hbm [thread:$0]  %s636, 32, %s10, [#allocation3]
    $region45: #{tpu_custom_call.1} parent=1 // pred_fallthru
      _
    // Predicated region
    $region46: #{tpu_custom_call.1} parent=1 // pred_check
      _
    $region47: #{tpu_custom_call.1} parent=1 // pred_check_branch
      %640 = sbr.rel (0) target = $region49
    $region48: #{tpu_custom_call.1} parent=1 // pred_region
      _
    $region49: #{tpu_custom_call.1} parent=1 // pred_fallthru
      _
    // Predicated region
    $region50: #{tpu_custom_call.1} parent=1 // pred_check
      _
    $region51: #{tpu_custom_call.1} parent=1 // pred_check_branch
      %642 = sbr.rel (0) target = $region53
    $region52: #{tpu_custom_call.1} parent=1 // pred_region
      %643 = dma.done [#allocation3], 32
    $region53: #{tpu_custom_call.1} parent=1 // pred_fallthru
      _
    // Predicated region
    $region54: #{tpu_custom_call.1} parent=1 // pred_check
      _
    $region55: #{tpu_custom_call.1} parent=1 // pred_check_branch
      %645 = sbr.rel (0) target = $region57
    $region56: #{tpu_custom_call.1} parent=1 // pred_region
      _
    $region57: #{tpu_custom_call.1} parent=1 // pred_fallthru
      _
    %646 = vsyncpa [#allocation3], 1

</llo_original>
